<compile_context>
chip_gen: v5e
topology: v5e:2x2
jax: 0.10.0
libtpu: 0.0.40
codegen_flags: <defaults>
</compile_context>

<pallas_src>
import functools

import numpy as np

import jax
import jax.numpy as jnp
from jax.experimental import pallas as pl
from jax.experimental.pallas import tpu as pltpu


def _round_up(x, m):
    return ((x + m - 1) // m) * m


def _patch_embed_kernel(p_ref, w_ref, b_ref, o_ref):
    # p_ref: (TM, K) patch tile (streamed over M); w_ref: (K, E) projection
    # (VMEM-resident via constant index_map); b_ref: (1, E) f32 bias
    # (resident); o_ref: (TM, E) output tile.
    acc = jnp.dot(p_ref[...], w_ref[...], preferred_element_type=jnp.float32)
    o_ref[...] = (acc + b_ref[...]).astype(o_ref.dtype)


def _pick_tm(M, K, E, in_bytes, out_bytes, w_bytes, tm_max, vmem_budget):
    """Largest TM (multiple of 16) whose double-buffered in/out tiles plus the
    resident weight/bias fit `vmem_budget`; shrunk so the parallel grid has at
    least 2 steps (v7x megacore) whenever M is large enough to split."""
    fixed = 2 * K * E * w_bytes + 2 * E * 4            # weight + bias buffers
    per_row = 2 * (K * in_bytes + E * out_bytes)       # in + out, double-buffered
    tm = max(16, (vmem_budget - fixed) // per_row)
    tm = min(tm, tm_max)
    tm = max(16, (tm // 16) * 16)
    if tm >= M:
        tm = M                                         # single full-dim block is always legal
    # Guarantee >= 2 grid steps so both v7x TensorCores get work.
    if pl.cdiv(M, tm) < 2 and M >= 32:
        tm = _round_up(pl.cdiv(M, 2), 16)              # multiple of 16, < M for M >= 32
    return tm


def patch_embedding(x, weight, bias, patch_size, *, compute_dtype=None,
                    out_dtype=None, tm_max=2048, vmem_budget=24 << 20):
    """ViT patch embedding: Conv2d(stride=P) -> flatten(2) -> transpose(1, 2).

    x: (B, C, H, W); weight: (E, C, P, P); bias: (E,).  Returns (B, N, E).
    f32 inputs default to bf16 matmul operands (accumulation stays f32); pass
    compute_dtype=jnp.float32 for exact f32, and out_dtype (e.g. bf16) to halve
    the output store traffic when the consumer accepts it."""
    B, C, H, W = x.shape
    P = patch_size
    E = weight.shape[0]
    assert H % P == 0 and W % P == 0, "spatial dims must be divisible by patch_size"
    Hp, Wp = H // P, W // P
    N = Hp * Wp
    K = C * P * P
    M = B * N

    if compute_dtype is None:
        compute_dtype = jnp.bfloat16 if x.dtype == jnp.float32 else x.dtype
    if out_dtype is None:
        out_dtype = x.dtype

    # --- Glue (plain JAX; fuses with the cast into one HBM pass under jit).
    # Cast *before* the patchify transpose so the materialized (M, K) patches
    # intermediate is already in the narrower compute dtype.  Feature order
    # (c, ph, pw) matches the Conv2d weight layout (E, C, P, P).
    # TODO(synk): fuse the patchify itself into the kernel (grid over (b, hp)
    # on the 6-D x view) once Mosaic handles the required in-tile N-D relayout
    # efficiently; today that transpose is better left to an XLA fusion.
    xc = x.astype(compute_dtype)
    patches = (
        xc.reshape(B, C, Hp, P, Wp, P)
        .transpose(0, 2, 4, 1, 3, 5)
        .reshape(M, K)
    )
    w2d = weight.reshape(E, K).T.astype(compute_dtype)    # (K, E)
    b2d = bias.reshape(1, E).astype(jnp.float32)          # (1, E), f32 add once

    in_bytes = np.dtype(compute_dtype).itemsize
    w_bytes = in_bytes
    out_bytes = np.dtype(out_dtype).itemsize

    TM = _pick_tm(M, K, E, in_bytes, out_bytes, w_bytes, tm_max, vmem_budget)
    grid = (pl.cdiv(M, TM),)   # ragged last block masked by Pallas; no M padding

    cost = pl.CostEstimate(
        flops=2 * M * K * E,
        transcendentals=0,
        bytes_accessed=M * K * in_bytes + K * E * w_bytes + M * E * out_bytes + E * 4,
    )

    # TODO(synk): tag the weight/bias specs with pipeline_mode=pl.Buffered(1)
    # (constant index_map => the second pipeline buffer is wasted VMEM) once
    # the installed Pallas accepts pipeline_mode on pallas_call BlockSpecs.
    out = pl.pallas_call(
        _patch_embed_kernel,
        out_shape=jax.ShapeDtypeStruct((M, E), out_dtype),
        grid=grid,
        in_specs=[
            pl.BlockSpec((TM, K), lambda i: (i, 0)),   # patches: streamed over M
            pl.BlockSpec((K, E), lambda i: (0, 0)),    # weight: VMEM-resident
            pl.BlockSpec((1, E), lambda i: (0, 0)),    # bias: VMEM-resident
        ],
        out_specs=pl.BlockSpec((TM, E), lambda i: (i, 0)),
        compiler_params=pltpu.CompilerParams(
            dimension_semantics=("parallel",),          # megacore split on v7x
            vmem_limit_bytes=48 * 1024 * 1024,          # > tile budget, < v7x 64 MiB/TC
        ),
        cost_estimate=cost,
    )(patches, w2d, b2d)

    return out.reshape(B, N, E)   # free: no slice, no copy


if __name__ == "__main__":
    # Small shapes consistent with the module: B=2, C=4, H=W=16, patch=4, E=32.
    B, C, H, W = 2, 4, 16, 16
    patch_size = 4
    embed_dim = 32

    key = jax.random.PRNGKey(0)
    kx, kw, kb = jax.random.split(key, 3)
    x = jax.random.normal(kx, (B, C, H, W), dtype=jnp.float32)
    weight = jax.random.normal(
        kw, (embed_dim, C, patch_size, patch_size), dtype=jnp.float32) * 0.02
    bias = jax.random.normal(kb, (embed_dim,), dtype=jnp.float32) * 0.02

    # Reference: plain-JAX Conv2d(stride=P) -> flatten(2) -> transpose(1, 2).
    ref_conv = jax.lax.conv_general_dilated(
        x, weight,
        window_strides=(patch_size, patch_size),
        padding="VALID",
        dimension_numbers=("NCHW", "OIHW", "NCHW"),
    ) + bias.reshape(1, embed_dim, 1, 1)
    ref = ref_conv.reshape(B, embed_dim, -1).transpose(0, 2, 1)   # (B, N, E)

    # Exact f32 operand path -- tight numerical check.
    f32_fn = jax.jit(functools.partial(
        patch_embedding, patch_size=patch_size, compute_dtype=jnp.float32))
    out_f32 = jax.block_until_ready(f32_fn(x, weight, bias))
    assert out_f32.shape == ref.shape, (out_f32.shape, ref.shape)
    assert jnp.allclose(out_f32, ref, atol=1e-4, rtol=1e-4), \
        float(jnp.max(jnp.abs(out_f32 - ref)))

    # Default path (bf16 operands, f32 accumulation) -- looser check, expected
    # precision loss from bf16 operands, not a kernel bug.
    bf16_fn = jax.jit(functools.partial(patch_embedding, patch_size=patch_size))
    out_bf16 = jax.block_until_ready(bf16_fn(x, weight, bias))
    assert out_bf16.shape == ref.shape, (out_bf16.shape, ref.shape)
    assert jnp.allclose(out_bf16, ref, atol=2e-2, rtol=2e-2), \
        float(jnp.max(jnp.abs(out_bf16 - ref)))

    print("KERNEL_OK")
</pallas_src>

<mosaic_0001>
module attributes {stable_mosaic.version = 11 : i64} {
  func.func @_patch_embed_kernel(%arg0: i32, %arg1: memref<16x64xf32, #tpu.memory_space<vmem>>, %arg2: memref<64x32xf32, #tpu.memory_space<vmem>>, %arg3: memref<1x32xf32, #tpu.memory_space<vmem>>, %arg4: memref<16x32xf32, #tpu.memory_space<vmem>>) attributes {dimension_semantics = [#tpu.dimension_semantics<parallel>], iteration_bounds = array<i64: 2>, scalar_prefetch = 0 : i64, scratch_operands = 0 : i64, tpu.core_type = #tpu.core_type<tc>, window_params = [{transform_indices = @transform_0, window_bounds = array<i64: 16, 64>}, {pipeline_mode = #tpu.pipeline_mode<synchronous>, transform_indices = @transform_1, window_bounds = array<i64: 64, 32>}, {pipeline_mode = #tpu.pipeline_mode<synchronous>, transform_indices = @transform_2, window_bounds = array<i64: 1, 32>}, {transform_indices = @transform_3, window_bounds = array<i64: 16, 32>}]} {
    %c0 = arith.constant 0 : index
    %c0_0 = arith.constant 0 : index
    %0 = vector.load %arg1[%c0, %c0_0] : memref<16x64xf32, #tpu.memory_space<vmem>>, vector<16x64xf32>
    %c0_1 = arith.constant 0 : index
    %c0_2 = arith.constant 0 : index
    %1 = vector.load %arg2[%c0_1, %c0_2] : memref<64x32xf32, #tpu.memory_space<vmem>>, vector<64x32xf32>
    %cst = arith.constant dense<0.000000e+00> : vector<16x32xf32>
    %2 = tpu.matmul %0, %1, %cst {dimension_numbers = #tpu.dot_dimension_numbers<[1], [0], [0], [1], [0, 0, 1, 1], [], []>} : vector<16x64xf32>, vector<64x32xf32>, vector<16x32xf32> -> vector<16x32xf32>
    %c0_3 = arith.constant 0 : index
    %c0_4 = arith.constant 0 : index
    %3 = vector.load %arg3[%c0_3, %c0_4] : memref<1x32xf32, #tpu.memory_space<vmem>>, vector<1x32xf32>
    %4 = vector.broadcast %3 : vector<1x32xf32> to vector<16x32xf32>
    %5 = arith.addf %2, %4 : vector<16x32xf32>
    %c0_5 = arith.constant 0 : index
    %c0_6 = arith.constant 0 : index
    %6 = vector.load %arg4[%c0_5, %c0_6] : memref<16x32xf32, #tpu.memory_space<vmem>>, vector<16x32xf32>
    tpu.vector_store %arg4[%c0_5, %c0_6], %5 {strides = array<i32>} : memref<16x32xf32, #tpu.memory_space<vmem>>, vector<16x32xf32>,
    return
  }
  func.func @transform_0(%arg0: i32) -> (i32, i32) {
    %c0_i32 = arith.constant 0 : i32
    %c0_i32_0 = arith.constant 0 : i32
    return %arg0, %c0_i32 : i32, i32
  }
  func.func @transform_1(%arg0: i32) -> (i32, i32) {
    %c0_i32 = arith.constant 0 : i32
    %c0_i32_0 = arith.constant 0 : i32
    %c0_i32_1 = arith.constant 0 : i32
    return %c0_i32, %c0_i32_0 : i32, i32
  }
  func.func @transform_2(%arg0: i32) -> (i32, i32) {
    %c0_i32 = arith.constant 0 : i32
    %c0_i32_0 = arith.constant 0 : i32
    %c0_i32_1 = arith.constant 0 : i32
    return %c0_i32, %c0_i32_0 : i32, i32
  }
  func.func @transform_3(%arg0: i32) -> (i32, i32) {
    %c0_i32 = arith.constant 0 : i32
    %c0_i32_0 = arith.constant 0 : i32
    return %arg0, %c0_i32 : i32, i32
  }
}

</mosaic_0001>

<llo_original>
// kernel: patch_embedding.1
$region0: #{patch_embedding.1}
  #allocation0 [shape = 'u32[]', space=smem, size = 0x4, offset = 0x4, fixed_abs, tag = 'smem constant byte address 0x4 - core index']
  #allocation1 [shape = 'u32[72,128]{1,0:T(1,128)}', space=vmem, size = 0x9000, scoped, tag = 'internal scratch']
  %s0 = inlined_call_operand.vmem [shape: f32[32,64], index: 0, kind: input, shape index: {}]
  %s1 = inlined_call_operand.vmem [shape: f32[64,32], index: 1, kind: input, shape index: {}]
  %s2 = inlined_call_operand.vmem [shape: f32[1,32], index: 2, kind: input, shape index: {}]
  %s3 = inlined_call_operand.hbm [shape: f32[32,32], index: 3, kind: output, shape index: {}]
  %s4 = sld [smem:[#allocation0]]
  $region45: #{patch_embedding.1} parent=0
    _
  %s6 = ssub.s32 1, %s4
  %s7 = scalar_select 0, %s6, %s4
  $region1: #{patch_embedding.1} parent=0
    #allocation2 [shape = 'u8[16384]{0}', space=vmem, size = 0x4000, scoped, tag = 'output window, operand 0']
    #allocation3 [shape = 's32[2]{0}', space=sflag, size = 0x8, scoped, tag = 'scoped memory for patch_embedding.1']
    %8 = vsyncpa [#allocation3], 0
    %s9 = scalar_lea.sflag [#allocation3], 1
    %10 = vsyncpa %s9, 0
    loop: start=0, step=1, limit=4
    $region2: #{patch_embedding.1} parent=1 // loop_pre_header
      _
    $region3: #{patch_embedding.1} parent=1 // loop_header
      %s12 = sphi 0, %s16
      %p13 = scmp.ge.s32.totalorder %s12, 4
      %s22 = sphi 0, %s24
      %s25 = sphi 0, %s22
      %s26 = sphi 0, %s25
      %s42 = sphi 0, %s26
      %s46 = sphi 0, %s46
      %s48 = sphi 0, %s46
      %s49 = sphi 0, %s48
      %s63 = sphi 0, %s49
      %s67 = sphi 0, %s67
      %s69 = sphi 0, %s67
      %s70 = sphi 0, %s69
      %s84 = sphi 0, %s70
      %s90 = sphi 0, %s92
      %s93 = sphi 0, %s90
      %s94 = sphi 0, %s93
      %s110 = sphi 0, %s94
    $region4: #{patch_embedding.1} parent=1 // loop_header_branch
      %15 = sbr.rel (%p13) target = $region8
    $region5: #{patch_embedding.1} parent=1 // loop_body
      %s17 = ssub.s32 %s12, 1
      %s18 = ssub.s32 %s12, 2
      %s19 = sadd.s32 %s12, 1
      %s20 = ssub.s32 %s12, %s19
      %p21 = scmp.eq.s32.totalorder %s20, 0
      %s23 = sadd.s32 %s22, 1
      %s24 = scalar_select %p21, %s22, %s23
      %p27 = pneg %p21
      %p28 = scmp.eq.s32.totalorder %s12, 1
      %p29 = por %p27, %p28
      %p30 = scmp.ne.s32.totalorder %s22, %s25
      %p31 = scmp.eq.s32.totalorder %s12, 0
      %p32 = por %p30, %p31
      %p33 = scmp.ne.s32.totalorder %s22, %s25
      %p34 = scmp.eq.s32.totalorder %s17, 1
      %p35 = por %p33, %p34
      %p36 = scmp.ne.s32.totalorder %s25, %s26
      %p37 = scmp.eq.s32.totalorder %s17, 0
      %p38 = por %p36, %p37
      %p39 = scmp.ne.s32.totalorder %s25, %s26
      %p40 = scmp.eq.s32.totalorder %s18, 1
      %p41 = por %p39, %p40
      %p43 = scmp.ne.s32.totalorder %s26, %s42
      %p44 = scmp.eq.s32.totalorder %s18, 0
      %p45 = por %p43, %p44
      %s47 = sadd.s32 %s46, 1
      %p50 = scmp.eq.s32.totalorder %s12, 1
      %p51 = scmp.ne.s32.totalorder %s46, %s48
      %p52 = scmp.eq.s32.totalorder %s12, 0
      %p53 = por %p51, %p52
      %p54 = scmp.ne.s32.totalorder %s46, %s48
      %p55 = scmp.eq.s32.totalorder %s17, 1
      %p56 = por %p54, %p55
      %p57 = scmp.ne.s32.totalorder %s48, %s49
      %p58 = scmp.eq.s32.totalorder %s17, 0
      %p59 = por %p57, %p58
      %p60 = scmp.ne.s32.totalorder %s48, %s49
      %p61 = scmp.eq.s32.totalorder %s18, 1
      %p62 = por %p60, %p61
      %p64 = scmp.ne.s32.totalorder %s49, %s63
      %p65 = scmp.eq.s32.totalorder %s18, 0
      %p66 = por %p64, %p65
      %s68 = sadd.s32 %s67, 1
      %p71 = scmp.eq.s32.totalorder %s12, 1
      %p72 = scmp.ne.s32.totalorder %s67, %s69
      %p73 = scmp.eq.s32.totalorder %s12, 0
      %p74 = por %p72, %p73
      %p75 = scmp.ne.s32.totalorder %s67, %s69
      %p76 = scmp.eq.s32.totalorder %s17, 1
      %p77 = por %p75, %p76
      %p78 = scmp.ne.s32.totalorder %s69, %s70
      %p79 = scmp.eq.s32.totalorder %s17, 0
      %p80 = por %p78, %p79
      %p81 = scmp.ne.s32.totalorder %s69, %s70
      %p82 = scmp.eq.s32.totalorder %s18, 1
      %p83 = por %p81, %p82
      %p85 = scmp.ne.s32.totalorder %s70, %s84
      %p86 = scmp.eq.s32.totalorder %s18, 0
      %p87 = por %p85, %p86
      %s88 = ssub.s32 %s12, %s19
      %p89 = scmp.eq.s32.totalorder %s88, 0
      %s91 = sadd.s32 %s90, 1
      %s92 = scalar_select %p89, %s90, %s91
      %p95 = pneg %p89
      %p96 = scmp.eq.s32.totalorder %s12, 1
      %p97 = por %p95, %p96
      %p98 = scmp.ne.s32.totalorder %s90, %s93
      %p99 = scmp.eq.s32.totalorder %s12, 0
      %p100 = por %p98, %p99
      %p101 = scmp.ne.s32.totalorder %s90, %s93
      %p102 = scmp.eq.s32.totalorder %s17, 1
      %p103 = por %p101, %p102
      %p104 = scmp.ne.s32.totalorder %s93, %s94
      %p105 = scmp.eq.s32.totalorder %s17, 0
      %p106 = por %p104, %p105
      %p107 = scmp.ne.s32.totalorder %s93, %s94
      %p108 = scmp.eq.s32.totalorder %s18, 1
      %p109 = por %p107, %p108
      %p111 = scmp.ne.s32.totalorder %s94, %s110
      %p112 = scmp.eq.s32.totalorder %s18, 0
      %p113 = por %p111, %p112
      %p114 = scmp.le.s32.totalorder 1, %s12
      %p115 = scmp.lt.s32.totalorder %s12, 3
      %p116 = pnand %p114, %p115
      %p117 = pneg %p116
      // Predicated region
      $region9: #{patch_embedding.1} parent=5 // pred_check
        _
      $region10: #{patch_embedding.1} parent=5 // pred_check_branch
        %119 = sbr.rel (%p116) target = $region12
      $region11: #{patch_embedding.1} parent=5 // pred_region
        %s120 = ssub.s32 %s12, 1
        // Predicated region
        $region13: #{patch_embedding.1} parent=11 // pred_check
          %p121 = pneg %p59
        $region14: #{patch_embedding.1} parent=11 // pred_check_branch
          %123 = sbr.rel (%p121) target = $region16
        $region15: #{patch_embedding.1} parent=11 // pred_region
          _
        $region16: #{patch_embedding.1} parent=11 // pred_fallthru
          _
        // Predicated region
        $region17: #{patch_embedding.1} parent=11 // pred_check
          %p124 = pneg %p80
        $region18: #{patch_embedding.1} parent=11 // pred_check_branch
          %126 = sbr.rel (%p124) target = $region20
        $region19: #{patch_embedding.1} parent=11 // pred_region
          _
        $region20: #{patch_embedding.1} parent=11 // pred_fallthru
          _
      $region12: #{patch_embedding.1} parent=5 // pred_fallthru
        _
      %p127 = scmp.lt.s32.totalorder %s12, 2
      // Predicated region
      $region21: #{patch_embedding.1} parent=5 // pred_check
        %p128 = pneg %p127
      $region22: #{patch_embedding.1} parent=5 // pred_check_branch
        %130 = sbr.rel (%p128) target = $region24
      $region23: #{patch_embedding.1} parent=5 // pred_region
        // Predicated region
        $region25: #{patch_embedding.1} parent=23 // pred_check
          %p131 = pneg %p32
        $region26: #{patch_embedding.1} parent=23 // pred_check_branch
          %133 = sbr.rel (%p131) target = $region28
        $region27: #{patch_embedding.1} parent=23 // pred_region
          %s134 = smul.u32 2, %s12
          %p135 = scmp.lt.s32.totalorder %s134, 3
          %s136 = scalar_select %p135, %s134, 3
          %s137 = smul.addr %s136, 8
          %s138 = scalar_lea.vmem %s0, %s137
          %s139 = smul.u32 2, %s12
        $region28: #{patch_embedding.1} parent=23 // pred_fallthru
          _
      $region24: #{patch_embedding.1} parent=5 // pred_fallthru
        _
      %p140 = scmp.le.s32.totalorder 1, %s12
      %p141 = scmp.lt.s32.totalorder %s12, 3
      %p142 = pnand %p140, %p141
      %p143 = pneg %p142
      // Predicated region
      $region29: #{patch_embedding.1} parent=5 // pred_check
        _
      $region30: #{patch_embedding.1} parent=5 // pred_check_branch
        %145 = sbr.rel (%p142) target = $region32
      $region31: #{patch_embedding.1} parent=5 // pred_region
        %s146 = ssub.s32 %s12, 1
        %s147 = smul.u32 2, %s17
        %p148 = scmp.lt.s32.totalorder %s147, 3
        %s149 = scalar_select %p148, %s147, 3
        %s150 = smul.addr %s149, 8
        %s151 = scalar_lea.vmem %s0, %s150
        %p152 = pneg %p38
        %p153 = pneg %p35
        %p154 = pneg %p59
        %p155 = pneg %p56
        %p156 = pneg %p80
        %p157 = pneg %p77
        %p158 = pneg %p106
        %p159 = pneg %p103
        %s160 = sand.u32 %s93, 1
        %s161 = scalar_lea.sflag [#allocation3], %s160
        %s162 = sand.u32 %s93, 1
        %s163 = smul.addr %s162, 16
        %s164 = scalar_lea.vmem [#allocation2], %s163
        %s165 = smul.u32 2, %s17
        %p166 = scmp.lt.s32.totalorder %s165, 3
        %s167 = scalar_select %p166, %s165, 3
        %s168 = smul.addr %s167, 8
        %s169 = scalar_lea.vmem %s0, %s168
        %s170 = smul.u32 2, %s17
        %s171 = smul.u32 2, %s17
        %v172 = vld [vmem:[%s169] sm:$0xff]
        %v173 = vld [vmem:[%s169 + $0x8] sm:$0xff]
        %v174 = vld [vmem:[%s1] sm:$0xff]
        %v175 = vld [vmem:[%s1 + $0x8] sm:$0xff]
        %v176 = vld [vmem:[%s1 + $0x10] sm:$0xff]
        %v177 = vld [vmem:[%s1 + $0x18] sm:$0xff]
        %v178 = vld [vmem:[%s1 + $0x20] sm:$0xff]
        %v179 = vld [vmem:[%s1 + $0x28] sm:$0xff]
        %v180 = vld [vmem:[%s1 + $0x30] sm:$0xff]
        %v181 = vld [vmem:[%s1 + $0x38] sm:$0xff]
        %v182 = vld [vmem:[%s2] sm:$0x1]
        %v184 = vperm.slane %v182, 0
        %vm186 = vcmask 523264
        %v188 = vsel %vm186, %v172, 0
        %v191 = vsel %vm186, %v173, 0
        %193 = vmatpush.msra.mxu0 0.0
        %194 = vmatpush.msra.mxu0 0.0
        %195 = vmatpush.msra.mxu0 0.0
        %196 = vmatpush.msra.mxu0 0.0
        %197 = vmatpush.msra.mxu0 0.0
        %198 = vmatpush.msra.mxu0 0.0
        %199 = vmatpush.msra.mxu0 0.0
        %200 = vmatpush.msra.mxu0 0.0
        %201 = vmatpush.msra.mxu0 %v181
        %202 = vmatpush.msra.mxu0 %v180
        %203 = vmatpush.msra.mxu0 %v179
        %204 = vmatpush.msra.mxu0 %v178
        %205 = vmatpush.msra.mxu0 %v177
        %206 = vmatpush.msra.mxu0 %v176
        %207 = vmatpush.msra.mxu0 %v175
        %208 = vmatpush.msra.mxu0 %v174
        %209 = vmatmul.f32.gmra.mxu0 %v188
        %v210 = vpop.f32.mrf.mxu0
        %v211 = vadd.f32 %v184, %v210
        %212 = vmatmul.f32.gmra.mxu0 %v191
        %v213 = vpop.f32.mrf.mxu0
        %v214 = vadd.f32 %v184, %v213
        %215 = vdwg.mxu0
        %vm216 = vcmask 261120
        %217 = vst.msk [vmem:[%s164] sm:$0xff] %vm216, %v211
        %218 = vst.msk [vmem:[%s164 + $0x8] sm:$0xff] %vm216, %v214
        %s219 = sand.u32 %s93, 1
        %s220 = scalar_lea.sflag [#allocation3], %s219
        %s221 = sand.u32 %s93, 1
        %s222 = smul.addr %s221, 16
        %s223 = scalar_lea.vmem [#allocation2], %s222
        // Predicated region
        $region33: #{patch_embedding.1} parent=31 // pred_check
          %p224 = pneg %p103
        $region34: #{patch_embedding.1} parent=31 // pred_check_branch
          %226 = sbr.rel (%p224) target = $region36
        $region35: #{patch_embedding.1} parent=31 // pred_region
          %s227 = smul.u32 2, %s17
          %229 = vsyncadd %s220, 0
          %s230 = smul.addr %s227, 8
          %s231 = scalar_lea.hbm %s3, %s230
          %s232 = sshll.u32 %s223, 4
          %s233 = int_to_ptr.vmem [resolvable:$true] %s232
          %s234 = sshll.u32 %s231, 4
          %s235 = int_to_ptr.hbm [resolvable:$true] %s234
          %240 = dma.vmem_to_hbm [thread:$0]  %s233, 256, %s235, %s220, 128, 128, 8
        $region36: #{patch_embedding.1} parent=31 // pred_fallthru
          _
      $region32: #{patch_embedding.1} parent=5 // pred_fallthru
        _
      %p241 = scmp.le.s32.totalorder 2, %s12
      // Predicated region
      $region37: #{patch_embedding.1} parent=5 // pred_check
        %p242 = pneg %p241
      $region38: #{patch_embedding.1} parent=5 // pred_check_branch
        %244 = sbr.rel (%p242) target = $region40
      $region39: #{patch_embedding.1} parent=5 // pred_region
        %s245 = ssub.s32 %s12, 2
        // Predicated region
        $region41: #{patch_embedding.1} parent=39 // pred_check
          %p246 = pneg %p109
        $region42: #{patch_embedding.1} parent=39 // pred_check_branch
          %248 = sbr.rel (%p246) target = $region44
        $region43: #{patch_embedding.1} parent=39 // pred_region
          %s249 = sand.u32 %s94, 1
          %s250 = scalar_lea.sflag [#allocation3], %s249
          %s251 = sand.u32 %s94, 1
          %s252 = smul.addr %s251, 16
          %s253 = scalar_lea.vmem [#allocation2], %s252
          %255 = dma.done %s250, 256
        $region44: #{patch_embedding.1} parent=39 // pred_fallthru
          _
      $region40: #{patch_embedding.1} parent=5 // pred_fallthru
        _
    $region6: #{patch_embedding.1} parent=1 // loop_footer
      %s16 = sadd.s32 1, %s12
    $region7: #{patch_embedding.1} parent=1 // loop_footer_branch
      %11 = sbr.rel target = $region3
    $region8: #{patch_embedding.1} parent=1 // loop_exit
      _
    %256 = vsyncpa [#allocation3], 1
    %s257 = scalar_lea.sflag [#allocation3], 1
    %258 = vsyncpa %s257, 1

</llo_original>
